<compile_context>
chip_gen: v6e
topology: v6e:2x2x1
jax: 0.10.0
libtpu: 0.0.40
codegen_flags: <defaults>
</compile_context>

<pallas_src>
import jax
import jax.numpy as jnp
from jax import lax
from jax.experimental import pallas as pl
from jax.experimental.pallas import tpu as pltpu


def bow_kernel(ids_ref, emb_ref, w_ref, bias_ref, out_ref):
    # ids_ref : VMEM (TB, S) int32 -- token ids for this batch tile
    # emb_ref : VMEM (V, E)  f32   -- embedding table (resident across grid)
    # w_ref   : VMEM (E, O)  f32   -- fc weight, transposed vs. PyTorch
    # bias_ref: VMEM (1, O)  f32   -- fc_bias + extra_bias, pre-folded on host
    # out_ref : VMEM (TB, O) f32
    TB, S = ids_ref.shape
    V = emb_ref.shape[0]

    ids = ids_ref[...]                                          # (TB, S) int32
    iota_v = lax.broadcasted_iota(jnp.int32, (TB, V), 1)        # lane dim = V

    # One-hot count vector over the vocab, accumulated with a short static
    # (fully visible / unrolled) loop over the sequence positions.
    counts = jnp.zeros((TB, V), jnp.float32)
    for s in range(S):                                          # S is small & static
        counts = counts + (iota_v == ids[:, s:s + 1]).astype(jnp.float32)
    counts = counts * (1.0 / S)                                 # fold mean scale

    # mean over sequence == counts @ embedding table  (single MXU pass)
    mean = jnp.dot(counts, emb_ref[...],
                   preferred_element_type=jnp.float32)          # (TB, E)
    # linear layer (second MXU pass) + fused bias
    out = jnp.dot(mean, w_ref[...],
                  preferred_element_type=jnp.float32)           # (TB, O)
    out_ref[...] = (out + bias_ref[...]).astype(out_ref.dtype)


def bow_forward(ids, emb_table, w_t, fc_bias, extra_bias, *, tb=8):
    """BoW forward for a batch of token-id sequences.

    ids: (S,) or (B, S) int32.  Returns (1, O) or (B, O) f32.
    """
    squeeze_batch = False
    if ids.ndim == 1:
        ids = ids[None, :]
        squeeze_batch = False  # PyTorch module already returns (1, O)
    B, S = ids.shape
    V, E = emb_table.shape
    O = w_t.shape[1]

    # Fold the two biases into a single (1, O) input.
    bias = (fc_bias + extra_bias).reshape(1, O).astype(jnp.float32)

    # Pad the batch up to a multiple of the tile size (tb rows per grid step).
    Bp = ((B + tb - 1) // tb) * tb
    if Bp != B:
        ids = jnp.pad(ids, ((0, Bp - B), (0, 0)))

    grid_spec = pltpu.PrefetchScalarGridSpec(
        num_scalar_prefetch=0,
        grid=(Bp // tb,),
        in_specs=[
            pl.BlockSpec((tb, S), lambda b: (b, 0)),   # ids tile
            pl.BlockSpec((V, E), lambda b: (0, 0)),    # emb table, resident
            pl.BlockSpec((E, O), lambda b: (0, 0)),    # fc weight, resident
            pl.BlockSpec((1, O), lambda b: (0, 0)),    # fused bias, resident
        ],
        out_specs=pl.BlockSpec((tb, O), lambda b: (b, 0)),
    )

    out = pl.pallas_call(
        bow_kernel,
        out_shape=jax.ShapeDtypeStruct((Bp, O), jnp.float32),
        grid_spec=grid_spec,
        compiler_params=pltpu.CompilerParams(
            dimension_semantics=("parallel",)),        # shard tiles across TCs
    )(ids, emb_table, w_t, bias)

    out = out[:B]
    return out[:1] if squeeze_batch else out


if __name__ == "__main__":
    vocab_size, embed_size, output_size, seq_len, batch = 64, 128, 128, 8, 32

    key = jax.random.PRNGKey(0)
    k_emb, k_w, k_fcb, k_ids = jax.random.split(key, 4)

    # nn.Embedding default init: N(0, 1)
    emb_table = jax.random.normal(k_emb, (vocab_size, embed_size), jnp.float32)

    # nn.Linear weight with xavier_uniform_ (weight shape (O, E))
    bound = (6.0 / (embed_size + output_size)) ** 0.5
    w = jax.random.uniform(k_w, (output_size, embed_size), jnp.float32, -bound, bound)
    w_t = w.T  # stored transposed for the kernel: (E, O)

    # nn.Linear bias default init: U(-1/sqrt(fan_in), 1/sqrt(fan_in))
    b_bound = 1.0 / (embed_size ** 0.5)
    fc_bias = jax.random.uniform(
        k_fcb, (1, output_size), jnp.float32, -b_bound, b_bound)

    # self.bias = nn.Parameter(torch.zeros(output_size))
    extra_bias = jnp.zeros((1, output_size), jnp.float32)

    # batch of token-id sequences, each row == one PyTorch forward(x) call
    ids_batch = jax.random.randint(
        k_ids, (batch, seq_len), 0, vocab_size, jnp.int32)

    out_b = jax.block_until_ready(
        bow_forward(ids_batch, emb_table, w_t, fc_bias, extra_bias))

    # pure-JAX reference of the PyTorch forward, row by row (vectorized)
    embeds = emb_table[ids_batch]                          # (B, S, E)
    mean = jnp.mean(embeds, axis=1)                        # (B, E)
    ref_b = (jnp.dot(mean, w.T, precision=jax.lax.Precision.HIGHEST)
             + fc_bias + extra_bias)                       # (B, O)

    assert out_b.shape == (batch, output_size)
    assert jnp.allclose(out_b, ref_b, atol=5e-3, rtol=5e-3), "batched mismatch"

    # single-sequence path: exactly the module's forward(x) with x of shape (S,)
    out_1 = jax.block_until_ready(
        bow_forward(ids_batch[0], emb_table, w_t, fc_bias, extra_bias))
    assert out_1.shape == (1, output_size)
    assert jnp.allclose(out_1, ref_b[0:1], atol=5e-3, rtol=5e-3), "single-seq mismatch"

    print("KERNEL_OK")
</pallas_src>

<mosaic_0001>
module attributes {stable_mosaic.version = 11 : i64} {
  func.func @bow_kernel(%arg0: i32, %arg1: memref<8x8xi32, #tpu.memory_space<vmem>>, %arg2: memref<64x128xf32, #tpu.memory_space<vmem>>, %arg3: memref<128x128xf32, #tpu.memory_space<vmem>>, %arg4: memref<1x128xf32, #tpu.memory_space<vmem>>, %arg5: memref<8x128xf32, #tpu.memory_space<vmem>>) attributes {dimension_semantics = [#tpu.dimension_semantics<parallel>], iteration_bounds = array<i64: 4>, scalar_prefetch = 0 : i64, scratch_operands = 0 : i64, tpu.core_type = #tpu.core_type<tc>, window_params = [{transform_indices = @transform_0, window_bounds = array<i64: 8, 8>}, {pipeline_mode = #tpu.pipeline_mode<synchronous>, transform_indices = @transform_1, window_bounds = array<i64: 64, 128>}, {pipeline_mode = #tpu.pipeline_mode<synchronous>, transform_indices = @transform_2, window_bounds = array<i64: 128, 128>}, {pipeline_mode = #tpu.pipeline_mode<synchronous>, transform_indices = @transform_3, window_bounds = array<i64: 1, 128>}, {transform_indices = @transform_4, window_bounds = array<i64: 8, 128>}]} {
    %c0 = arith.constant 0 : index
    %c0_0 = arith.constant 0 : index
    %0 = vector.load %arg1[%c0, %c0_0] : memref<8x8xi32, #tpu.memory_space<vmem>>, vector<8x8xi32>
    %1 = tpu.iota {dimensions = array<i32: 1>} : vector<8x64xi32>
    %cst = arith.constant 0.000000e+00 : f32
    %2 = vector.broadcast %cst : f32 to vector<8x64xf32>
    %3 = vector.extract_strided_slice %0 {offsets = [0, 0], sizes = [8, 1], strides = [1, 1]} : vector<8x8xi32> to vector<8x1xi32>
    %4 = vector.broadcast %3 : vector<8x1xi32> to vector<8x64xi32>
    %5 = arith.cmpi eq, %1, %4 : vector<8x64xi32>
    %6 = arith.extui %5 : vector<8x64xi1> to vector<8x64xi32>
    %7 = arith.sitofp %6 : vector<8x64xi32> to vector<8x64xf32>
    %8 = arith.addf %2, %7 : vector<8x64xf32>
    %9 = vector.extract_strided_slice %0 {offsets = [0, 1], sizes = [8, 1], strides = [1, 1]} : vector<8x8xi32> to vector<8x1xi32>
    %10 = vector.broadcast %9 : vector<8x1xi32> to vector<8x64xi32>
    %11 = arith.cmpi eq, %1, %10 : vector<8x64xi32>
    %12 = arith.extui %11 : vector<8x64xi1> to vector<8x64xi32>
    %13 = arith.sitofp %12 : vector<8x64xi32> to vector<8x64xf32>
    %14 = arith.addf %8, %13 : vector<8x64xf32>
    %15 = vector.extract_strided_slice %0 {offsets = [0, 2], sizes = [8, 1], strides = [1, 1]} : vector<8x8xi32> to vector<8x1xi32>
    %16 = vector.broadcast %15 : vector<8x1xi32> to vector<8x64xi32>
    %17 = arith.cmpi eq, %1, %16 : vector<8x64xi32>
    %18 = arith.extui %17 : vector<8x64xi1> to vector<8x64xi32>
    %19 = arith.sitofp %18 : vector<8x64xi32> to vector<8x64xf32>
    %20 = arith.addf %14, %19 : vector<8x64xf32>
    %21 = vector.extract_strided_slice %0 {offsets = [0, 3], sizes = [8, 1], strides = [1, 1]} : vector<8x8xi32> to vector<8x1xi32>
    %22 = vector.broadcast %21 : vector<8x1xi32> to vector<8x64xi32>
    %23 = arith.cmpi eq, %1, %22 : vector<8x64xi32>
    %24 = arith.extui %23 : vector<8x64xi1> to vector<8x64xi32>
    %25 = arith.sitofp %24 : vector<8x64xi32> to vector<8x64xf32>
    %26 = arith.addf %20, %25 : vector<8x64xf32>
    %27 = vector.extract_strided_slice %0 {offsets = [0, 4], sizes = [8, 1], strides = [1, 1]} : vector<8x8xi32> to vector<8x1xi32>
    %28 = vector.broadcast %27 : vector<8x1xi32> to vector<8x64xi32>
    %29 = arith.cmpi eq, %1, %28 : vector<8x64xi32>
    %30 = arith.extui %29 : vector<8x64xi1> to vector<8x64xi32>
    %31 = arith.sitofp %30 : vector<8x64xi32> to vector<8x64xf32>
    %32 = arith.addf %26, %31 : vector<8x64xf32>
    %33 = vector.extract_strided_slice %0 {offsets = [0, 5], sizes = [8, 1], strides = [1, 1]} : vector<8x8xi32> to vector<8x1xi32>
    %34 = vector.broadcast %33 : vector<8x1xi32> to vector<8x64xi32>
    %35 = arith.cmpi eq, %1, %34 : vector<8x64xi32>
    %36 = arith.extui %35 : vector<8x64xi1> to vector<8x64xi32>
    %37 = arith.sitofp %36 : vector<8x64xi32> to vector<8x64xf32>
    %38 = arith.addf %32, %37 : vector<8x64xf32>
    %39 = vector.extract_strided_slice %0 {offsets = [0, 6], sizes = [8, 1], strides = [1, 1]} : vector<8x8xi32> to vector<8x1xi32>
    %40 = vector.broadcast %39 : vector<8x1xi32> to vector<8x64xi32>
    %41 = arith.cmpi eq, %1, %40 : vector<8x64xi32>
    %42 = arith.extui %41 : vector<8x64xi1> to vector<8x64xi32>
    %43 = arith.sitofp %42 : vector<8x64xi32> to vector<8x64xf32>
    %44 = arith.addf %38, %43 : vector<8x64xf32>
    %45 = vector.extract_strided_slice %0 {offsets = [0, 7], sizes = [8, 1], strides = [1, 1]} : vector<8x8xi32> to vector<8x1xi32>
    %46 = vector.broadcast %45 : vector<8x1xi32> to vector<8x64xi32>
    %47 = arith.cmpi eq, %1, %46 : vector<8x64xi32>
    %48 = arith.extui %47 : vector<8x64xi1> to vector<8x64xi32>
    %49 = arith.sitofp %48 : vector<8x64xi32> to vector<8x64xf32>
    %50 = arith.addf %44, %49 : vector<8x64xf32>
    %cst_1 = arith.constant 1.250000e-01 : f32
    %51 = vector.broadcast %cst_1 : f32 to vector<8x64xf32>
    %52 = arith.mulf %50, %51 : vector<8x64xf32>
    %c0_2 = arith.constant 0 : index
    %c0_3 = arith.constant 0 : index
    %53 = vector.load %arg2[%c0_2, %c0_3] : memref<64x128xf32, #tpu.memory_space<vmem>>, vector<64x128xf32>
    %cst_4 = arith.constant dense<0.000000e+00> : vector<8x128xf32>
    %54 = tpu.matmul %52, %53, %cst_4 {dimension_numbers = #tpu.dot_dimension_numbers<[1], [0], [0], [1], [0, 0, 1, 1], [], []>} : vector<8x64xf32>, vector<64x128xf32>, vector<8x128xf32> -> vector<8x128xf32>
    %c0_5 = arith.constant 0 : index
    %c0_6 = arith.constant 0 : index
    %55 = vector.load %arg3[%c0_5, %c0_6] : memref<128x128xf32, #tpu.memory_space<vmem>>, vector<128x128xf32>
    %cst_7 = arith.constant dense<0.000000e+00> : vector<8x128xf32>
    %56 = tpu.matmul %54, %55, %cst_7 {dimension_numbers = #tpu.dot_dimension_numbers<[1], [0], [0], [1], [0, 0, 1, 1], [], []>} : vector<8x128xf32>, vector<128x128xf32>, vector<8x128xf32> -> vector<8x128xf32>
    %c0_8 = arith.constant 0 : index
    %c0_9 = arith.constant 0 : index
    %57 = vector.load %arg4[%c0_8, %c0_9] : memref<1x128xf32, #tpu.memory_space<vmem>>, vector<1x128xf32>
    %58 = vector.broadcast %57 : vector<1x128xf32> to vector<8x128xf32>
    %59 = arith.addf %56, %58 : vector<8x128xf32>
    %c0_10 = arith.constant 0 : index
    %c0_11 = arith.constant 0 : index
    %60 = vector.load %arg5[%c0_10, %c0_11] : memref<8x128xf32, #tpu.memory_space<vmem>>, vector<8x128xf32>
    tpu.vector_store %arg5[%c0_10, %c0_11], %59 {strides = array<i32>} : memref<8x128xf32, #tpu.memory_space<vmem>>, vector<8x128xf32>,
    return
  }
  func.func @transform_0(%arg0: i32) -> (i32, i32) {
    %c0_i32 = arith.constant 0 : i32
    %c0_i32_0 = arith.constant 0 : i32
    return %arg0, %c0_i32 : i32, i32
  }
  func.func @transform_1(%arg0: i32) -> (i32, i32) {
    %c0_i32 = arith.constant 0 : i32
    %c0_i32_0 = arith.constant 0 : i32
    %c0_i32_1 = arith.constant 0 : i32
    return %c0_i32, %c0_i32_0 : i32, i32
  }
  func.func @transform_2(%arg0: i32) -> (i32, i32) {
    %c0_i32 = arith.constant 0 : i32
    %c0_i32_0 = arith.constant 0 : i32
    %c0_i32_1 = arith.constant 0 : i32
    return %c0_i32, %c0_i32_0 : i32, i32
  }
  func.func @transform_3(%arg0: i32) -> (i32, i32) {
    %c0_i32 = arith.constant 0 : i32
    %c0_i32_0 = arith.constant 0 : i32
    %c0_i32_1 = arith.constant 0 : i32
    return %c0_i32, %c0_i32_0 : i32, i32
  }
  func.func @transform_4(%arg0: i32) -> (i32, i32) {
    %c0_i32 = arith.constant 0 : i32
    %c0_i32_0 = arith.constant 0 : i32
    return %arg0, %c0_i32 : i32, i32
  }
}

</mosaic_0001>

<llo_original>
// kernel: tpu_custom_call.1
$region0: #{tpu_custom_call.1}
  #allocation0 [shape = 'u32[]', space=smem, size = 0x4, offset = 0x4, fixed_abs, tag = 'smem constant byte address 0x4 - core index']
  #allocation1 [shape = 'u32[144,128]{1,0:T(1,128)}', space=vmem, size = 0x12000, scoped, tag = 'internal scratch']
  %s0 = inlined_call_operand.vmem [shape: s32[32,8], index: 0, kind: input, shape index: {}]
  %s1 = inlined_call_operand.hbm [shape: f32[64,128], index: 1, kind: input, shape index: {}]
  %s2 = inlined_call_operand.hbm [shape: f32[128,128], index: 2, kind: input, shape index: {}]
  %s3 = inlined_call_operand.vmem [shape: f32[1,128], index: 3, kind: input, shape index: {}]
  %s4 = inlined_call_operand.hbm [shape: f32[32,128], index: 4, kind: output, shape index: {}]
  %s5 = sld [smem:[#allocation0]]
  $region57: #{tpu_custom_call.1} parent=0
    _
  %s7 = ssub.s32 1, %s5
  %s8 = scalar_select 0, %s7, %s5
  $region1: #{tpu_custom_call.1} parent=0
    #allocation2 [shape = 'u8[32768]{0}', space=vmem, size = 0x8000, scoped, tag = 'input window, operand 1, single buffered']
    #allocation3 [shape = 's32[2]{0}', space=sflag, size = 0x8, scoped, tag = 'scoped memory for tpu_custom_call.1']
    #allocation4 [shape = 's32[2]{0}', space=sflag, size = 0x8, scoped, tag = 'scoped memory for tpu_custom_call.1']
    #allocation5 [shape = 'u8[65536]{0}', space=vmem, size = 0x10000, scoped, tag = 'input window, operand 2, single buffered']
    #allocation6 [shape = 's32[1]{0}', space=sflag, size = 0x4, scoped, tag = 'scoped memory for tpu_custom_call.1']
    #allocation7 [shape = 'u8[8192]{0}', space=vmem, size = 0x2000, scoped, tag = 'output window, operand 0']
    %9 = vsyncpa [#allocation3], 0
    %10 = vsyncpa [#allocation6], 0
    %11 = vsyncpa [#allocation4], 0
    %s12 = scalar_lea.sflag [#allocation4], 1
    %13 = vsyncpa %s12, 0
    loop: start=0, step=1, limit=6
    $region2: #{tpu_custom_call.1} parent=1 // loop_pre_header
      _
    $region3: #{tpu_custom_call.1} parent=1 // loop_header
      %s15 = sphi 0, %s19
      %p16 = scmp.ge.s32.totalorder %s15, 6
      %s25 = sphi 0, %s27
      %s28 = sphi 0, %s25
      %s29 = sphi 0, %s28
      %s45 = sphi 0, %s29
      %s49 = sphi 0, %s49
      %s51 = sphi 0, %s49
      %s52 = sphi 0, %s51
      %s66 = sphi 0, %s52
      %s70 = sphi 0, %s70
      %s72 = sphi 0, %s70
      %s73 = sphi 0, %s72
      %s87 = sphi 0, %s73
      %s91 = sphi 0, %s91
      %s93 = sphi 0, %s91
      %s94 = sphi 0, %s93
      %s108 = sphi 0, %s94
      %s114 = sphi 0, %s116
      %s117 = sphi 0, %s114
      %s118 = sphi 0, %s117
      %s134 = sphi 0, %s118
    $region4: #{tpu_custom_call.1} parent=1 // loop_header_branch
      %18 = sbr.rel (%p16) target = $region8
    $region5: #{tpu_custom_call.1} parent=1 // loop_body
      %s20 = ssub.s32 %s15, 1
      %s21 = ssub.s32 %s15, 2
      %s22 = sadd.s32 %s15, 1
      %s23 = ssub.s32 %s15, %s22
      %p24 = scmp.eq.s32.totalorder %s23, 0
      %s26 = sadd.s32 %s25, 1
      %s27 = scalar_select %p24, %s25, %s26
      %p30 = pneg %p24
      %p31 = scmp.eq.s32.totalorder %s15, 3
      %p32 = por %p30, %p31
      %p33 = scmp.ne.s32.totalorder %s25, %s28
      %p34 = scmp.eq.s32.totalorder %s15, 0
      %p35 = por %p33, %p34
      %p36 = scmp.ne.s32.totalorder %s25, %s28
      %p37 = scmp.eq.s32.totalorder %s20, 3
      %p38 = por %p36, %p37
      %p39 = scmp.ne.s32.totalorder %s28, %s29
      %p40 = scmp.eq.s32.totalorder %s20, 0
      %p41 = por %p39, %p40
      %p42 = scmp.ne.s32.totalorder %s28, %s29
      %p43 = scmp.eq.s32.totalorder %s21, 3
      %p44 = por %p42, %p43
      %p46 = scmp.ne.s32.totalorder %s29, %s45
      %p47 = scmp.eq.s32.totalorder %s21, 0
      %p48 = por %p46, %p47
      %s50 = sadd.s32 %s49, 1
      %p53 = scmp.eq.s32.totalorder %s15, 3
      %p54 = scmp.ne.s32.totalorder %s49, %s51
      %p55 = scmp.eq.s32.totalorder %s15, 0
      %p56 = por %p54, %p55
      %p57 = scmp.ne.s32.totalorder %s49, %s51
      %p58 = scmp.eq.s32.totalorder %s20, 3
      %p59 = por %p57, %p58
      %p60 = scmp.ne.s32.totalorder %s51, %s52
      %p61 = scmp.eq.s32.totalorder %s20, 0
      %p62 = por %p60, %p61
      %p63 = scmp.ne.s32.totalorder %s51, %s52
      %p64 = scmp.eq.s32.totalorder %s21, 3
      %p65 = por %p63, %p64
      %p67 = scmp.ne.s32.totalorder %s52, %s66
      %p68 = scmp.eq.s32.totalorder %s21, 0
      %p69 = por %p67, %p68
      %s71 = sadd.s32 %s70, 1
      %p74 = scmp.eq.s32.totalorder %s15, 3
      %p75 = scmp.ne.s32.totalorder %s70, %s72
      %p76 = scmp.eq.s32.totalorder %s15, 0
      %p77 = por %p75, %p76
      %p78 = scmp.ne.s32.totalorder %s70, %s72
      %p79 = scmp.eq.s32.totalorder %s20, 3
      %p80 = por %p78, %p79
      %p81 = scmp.ne.s32.totalorder %s72, %s73
      %p82 = scmp.eq.s32.totalorder %s20, 0
      %p83 = por %p81, %p82
      %p84 = scmp.ne.s32.totalorder %s72, %s73
      %p85 = scmp.eq.s32.totalorder %s21, 3
      %p86 = por %p84, %p85
      %p88 = scmp.ne.s32.totalorder %s73, %s87
      %p89 = scmp.eq.s32.totalorder %s21, 0
      %p90 = por %p88, %p89
      %s92 = sadd.s32 %s91, 1
      %p95 = scmp.eq.s32.totalorder %s15, 3
      %p96 = scmp.ne.s32.totalorder %s91, %s93
      %p97 = scmp.eq.s32.totalorder %s15, 0
      %p98 = por %p96, %p97
      %p99 = scmp.ne.s32.totalorder %s91, %s93
      %p100 = scmp.eq.s32.totalorder %s20, 3
      %p101 = por %p99, %p100
      %p102 = scmp.ne.s32.totalorder %s93, %s94
      %p103 = scmp.eq.s32.totalorder %s20, 0
      %p104 = por %p102, %p103
      %p105 = scmp.ne.s32.totalorder %s93, %s94
      %p106 = scmp.eq.s32.totalorder %s21, 3
      %p107 = por %p105, %p106
      %p109 = scmp.ne.s32.totalorder %s94, %s108
      %p110 = scmp.eq.s32.totalorder %s21, 0
      %p111 = por %p109, %p110
      %s112 = ssub.s32 %s15, %s22
      %p113 = scmp.eq.s32.totalorder %s112, 0
      %s115 = sadd.s32 %s114, 1
      %s116 = scalar_select %p113, %s114, %s115
      %p119 = pneg %p113
      %p120 = scmp.eq.s32.totalorder %s15, 3
      %p121 = por %p119, %p120
      %p122 = scmp.ne.s32.totalorder %s114, %s117
      %p123 = scmp.eq.s32.totalorder %s15, 0
      %p124 = por %p122, %p123
      %p125 = scmp.ne.s32.totalorder %s114, %s117
      %p126 = scmp.eq.s32.totalorder %s20, 3
      %p127 = por %p125, %p126
      %p128 = scmp.ne.s32.totalorder %s117, %s118
      %p129 = scmp.eq.s32.totalorder %s20, 0
      %p130 = por %p128, %p129
      %p131 = scmp.ne.s32.totalorder %s117, %s118
      %p132 = scmp.eq.s32.totalorder %s21, 3
      %p133 = por %p131, %p132
      %p135 = scmp.ne.s32.totalorder %s118, %s134
      %p136 = scmp.eq.s32.totalorder %s21, 0
      %p137 = por %p135, %p136
      %p138 = scmp.le.s32.totalorder 1, %s15
      %p139 = scmp.lt.s32.totalorder %s15, 5
      %p140 = pnand %p138, %p139
      %p141 = pneg %p140
      // Predicated region
      $region9: #{tpu_custom_call.1} parent=5 // pred_check
        _
      $region10: #{tpu_custom_call.1} parent=5 // pred_check_branch
        %143 = sbr.rel (%p140) target = $region12
      $region11: #{tpu_custom_call.1} parent=5 // pred_region
        %s144 = ssub.s32 %s15, 1
        // Predicated region
        $region13: #{tpu_custom_call.1} parent=11 // pred_check
          %p145 = pneg %p62
        $region14: #{tpu_custom_call.1} parent=11 // pred_check_branch
          %147 = sbr.rel (%p145) target = $region16
        $region15: #{tpu_custom_call.1} parent=11 // pred_region
          %s149 = ssub.s32 1024, 1024
          %150 = vsyncadd [#allocation3], %s149
          %s151 = sshll.u32 [#allocation2], 4
          %s152 = int_to_ptr.vmem [resolvable:$true] %s151
          %157 = dma.hbm_to_vmem [thread:$0]  %s1, 1024, %s152, [#allocation3], 128, 128, 8
        $region16: #{tpu_custom_call.1} parent=11 // pred_fallthru
          _
        // Predicated region
        $region17: #{tpu_custom_call.1} parent=11 // pred_check
          %p158 = pneg %p83
        $region18: #{tpu_custom_call.1} parent=11 // pred_check_branch
          %160 = sbr.rel (%p158) target = $region20
        $region19: #{tpu_custom_call.1} parent=11 // pred_region
          %s162 = ssub.s32 2048, 2048
          %163 = vsyncadd [#allocation6], %s162
          %s164 = sshll.u32 [#allocation5], 4
          %s165 = int_to_ptr.vmem [resolvable:$true] %s164
          %170 = dma.hbm_to_vmem [thread:$0]  %s2, 2048, %s165, [#allocation6], 128, 128, 8
        $region20: #{tpu_custom_call.1} parent=11 // pred_fallthru
          _
        // Predicated region
        $region21: #{tpu_custom_call.1} parent=11 // pred_check
          %p171 = pneg %p104
        $region22: #{tpu_custom_call.1} parent=11 // pred_check_branch
          %173 = sbr.rel (%p171) target = $region24
        $region23: #{tpu_custom_call.1} parent=11 // pred_region
          _
        $region24: #{tpu_custom_call.1} parent=11 // pred_fallthru
          _
      $region12: #{tpu_custom_call.1} parent=5 // pred_fallthru
        _
      %p174 = scmp.lt.s32.totalorder %s15, 4
      // Predicated region
      $region25: #{tpu_custom_call.1} parent=5 // pred_check
        %p175 = pneg %p174
      $region26: #{tpu_custom_call.1} parent=5 // pred_check_branch
        %177 = sbr.rel (%p175) target = $region28
      $region27: #{tpu_custom_call.1} parent=5 // pred_region
        // Predicated region
        $region29: #{tpu_custom_call.1} parent=27 // pred_check
          %p178 = pneg %p35
        $region30: #{tpu_custom_call.1} parent=27 // pred_check_branch
          %180 = sbr.rel (%p178) target = $region32
        $region31: #{tpu_custom_call.1} parent=27 // pred_region
          %p181 = scmp.lt.s32.totalorder %s15, 3
          %s182 = scalar_select %p181, %s15, 3
          %s183 = smul.addr %s182, 8
          %s184 = scalar_lea.vmem %s0, %s183
        $region32: #{tpu_custom_call.1} parent=27 // pred_fallthru
          _
      $region28: #{tpu_custom_call.1} parent=5 // pred_fallthru
        _
      %p185 = scmp.le.s32.totalorder 1, %s15
      %p186 = scmp.lt.s32.totalorder %s15, 5
      %p187 = pnand %p185, %p186
      %p188 = pneg %p187
      // Predicated region
      $region33: #{tpu_custom_call.1} parent=5 // pred_check
        _
      $region34: #{tpu_custom_call.1} parent=5 // pred_check_branch
        %190 = sbr.rel (%p187) target = $region36
      $region35: #{tpu_custom_call.1} parent=5 // pred_region
        %s191 = ssub.s32 %s15, 1
        // Predicated region
        $region37: #{tpu_custom_call.1} parent=35 // pred_check
          %p192 = pneg %p62
        $region38: #{tpu_custom_call.1} parent=35 // pred_check_branch
          %194 = sbr.rel (%p192) target = $region40
        $region39: #{tpu_custom_call.1} parent=35 // pred_region
          %195 = dma.done [#allocation3], 1024
        $region40: #{tpu_custom_call.1} parent=35 // pred_fallthru
          _
        // Predicated region
        $region41: #{tpu_custom_call.1} parent=35 // pred_check
          %p196 = pneg %p83
        $region42: #{tpu_custom_call.1} parent=35 // pred_check_branch
          %198 = sbr.rel (%p196) target = $region44
        $region43: #{tpu_custom_call.1} parent=35 // pred_region
          %199 = dma.done [#allocation6], 2048
        $region44: #{tpu_custom_call.1} parent=35 // pred_fallthru
          _
        %p200 = scmp.lt.s32.totalorder %s20, 3
        %s201 = scalar_select %p200, %s20, 3
        %s202 = smul.addr %s201, 8
        %s203 = scalar_lea.vmem %s0, %s202
        %p204 = pneg %p41
        %p205 = pneg %p38
        %p206 = pneg %p62
        %p207 = pneg %p59
        %p208 = pneg %p83
        %p209 = pneg %p80
        %p210 = pneg %p104
        %p211 = pneg %p101
        %p212 = pneg %p130
        %p213 = pneg %p127
        %s214 = sand.u32 %s117, 1
        %s215 = scalar_lea.sflag [#allocation4], %s214
        %s216 = sand.u32 %s117, 1
        %s217 = smul.addr %s216, 8
        %s218 = scalar_lea.vmem [#allocation7], %s217
        %p219 = scmp.lt.s32.totalorder %s20, 3
        %s220 = scalar_select %p219, %s20, 3
        %s221 = smul.addr %s220, 8
        %s222 = scalar_lea.vmem %s0, %s221
        %v223 = vld [vmem:[%s222] sm:$0xff]
        %v224 = vlaneseq
        %v225 = vand.u32 %v224, 127
        %226 = vset.pattern.permute.xlu0 0
        %227 = vperm.xlu0 %226, %v223
        %v228 = vpop.permute.xlu0 %227
        %vm229 = vcmp.eq.s32.totalorder %v225, %v228
        %v230 = vsel %vm229, 1, 0
        %v231 = vcvt.s32.f32 %v230
        %v232 = vadd.f32 %v231, 0.0
        %233 = vset.pattern.permute.xlu0 1
        %234 = vperm.xlu0 %233, %v223
        %v235 = vpop.permute.xlu0 %234
        %vm236 = vcmp.eq.s32.totalorder %v225, %v235
        %v237 = vsel %vm236, 1, 0
        %v238 = vcvt.s32.f32 %v237
        %v239 = vadd.f32 %v232, %v238
        %240 = vset.pattern.permute.xlu0 2
        %241 = vperm.xlu0 %240, %v223
        %v242 = vpop.permute.xlu0 %241
        %vm243 = vcmp.eq.s32.totalorder %v225, %v242
        %v244 = vsel %vm243, 1, 0
        %v245 = vcvt.s32.f32 %v244
        %v246 = vadd.f32 %v239, %v245
        %247 = vset.pattern.permute.xlu0 3
        %248 = vperm.xlu0 %247, %v223
        %v249 = vpop.permute.xlu0 %248
        %vm250 = vcmp.eq.s32.totalorder %v225, %v249
        %v251 = vsel %vm250, 1, 0
        %v252 = vcvt.s32.f32 %v251
        %v253 = vadd.f32 %v246, %v252
        %254 = vset.pattern.permute.xlu0 4
        %255 = vperm.xlu0 %254, %v223
        %v256 = vpop.permute.xlu0 %255
        %vm257 = vcmp.eq.s32.totalorder %v225, %v256
        %v258 = vsel %vm257, 1, 0
        %v259 = vcvt.s32.f32 %v258
        %v260 = vadd.f32 %v253, %v259
        %261 = vset.pattern.permute.xlu0 5
        %262 = vperm.xlu0 %261, %v223
        %v263 = vpop.permute.xlu0 %262
        %vm264 = vcmp.eq.s32.totalorder %v225, %v263
        %v265 = vsel %vm264, 1, 0
        %v266 = vcvt.s32.f32 %v265
        %v267 = vadd.f32 %v260, %v266
        %268 = vset.pattern.permute.xlu0 6
        %269 = vperm.xlu0 %268, %v223
        %v270 = vpop.permute.xlu0 %269
        %vm271 = vcmp.eq.s32.totalorder %v225, %v270
        %v272 = vsel %vm271, 1, 0
        %v273 = vcvt.s32.f32 %v272
        %v274 = vadd.f32 %v267, %v273
        %275 = vset.pattern.permute.xlu0 7
        %276 = vperm.xlu0 %275, %v223
        %v277 = vpop.permute.xlu0 %276
        %vm278 = vcmp.eq.s32.totalorder %v225, %v277
        %v279 = vsel %vm278, 1, 0
        %v280 = vcvt.s32.f32 %v279
        %v281 = vadd.f32 %v274, %v280
        %v282 = vmul.f32 %v281, 0.125
        %v283 = vld [vmem:[#allocation2] sm:$0xff]
        %v284 = vld [vmem:[#allocation2 + $0x8] sm:$0xff]
        %v285 = vld [vmem:[#allocation2 + $0x10] sm:$0xff]
        %v286 = vld [vmem:[#allocation2 + $0x18] sm:$0xff]
        %v287 = vld [vmem:[#allocation2 + $0x20] sm:$0xff]
        %v288 = vld [vmem:[#allocation2 + $0x28] sm:$0xff]
        %v289 = vld [vmem:[#allocation2 + $0x30] sm:$0xff]
        %v290 = vld [vmem:[#allocation2 + $0x38] sm:$0xff]
        %vm291 = vcmask 523264
        %v293 = vsel %vm291, %v282, 0
        %295 = vmatprep.subr.mxu0 0.0
        %296 = vmatpush1.msra.mxu0 0.0
        %297 = vmatprep.subr.mxu0 0.0
        %298 = vmatpush1.msra.mxu0 0.0
        %299 = vmatprep.subr.mxu0 0.0
        %300 = vmatpush1.msra.mxu0 0.0
        %301 = vmatprep.subr.mxu0 0.0
        %302 = vmatpush1.msra.mxu0 0.0
        %303 = vmatprep.subr.mxu0 0.0
        %304 = vmatpush1.msra.mxu0 0.0
        %305 = vmatprep.subr.mxu0 0.0
        %306 = vmatpush1.msra.mxu0 0.0
        %307 = vmatprep.subr.mxu0 0.0
        %308 = vmatpush1.msra.mxu0 0.0
        %309 = vmatprep.subr.mxu0 0.0
        %310 = vmatpush1.msra.mxu0 0.0
        %311 = vmatprep.subr.mxu0 0.0
        %312 = vmatpush1.msra.mxu0 %v290
        %313 = vmatprep.subr.mxu0 0.0
        %314 = vmatpush1.msra.mxu0 %v289
        %315 = vmatprep.subr.mxu0 0.0
        %316 = vmatpush1.msra.mxu0 %v288
        %317 = vmatprep.subr.mxu0 0.0
        %318 = vmatpush1.msra.mxu0 %v287
        %319 = vmatprep.subr.mxu0 0.0
        %320 = vmatpush1.msra.mxu0 %v286
        %321 = vmatprep.subr.mxu0 0.0
        %322 = vmatpush1.msra.mxu0 %v285
        %323 = vmatprep.subr.mxu0 0.0
        %324 = vmatpush1.msra.mxu0 %v284
        %325 = vmatprep.subr.mxu0 0.0
        %326 = vmatpush1.msra.mxu0 %v283
        %327 = vmatprep.subr.mxu0 0.0
        %328 = vmatpush2.msra.mxu0 0.0
        %329 = vmatprep.subr.mxu0 0.0
        %330 = vmatpush2.msra.mxu0 0.0
        %331 = vmatprep.subr.mxu0 0.0
        %332 = vmatpush2.msra.mxu0 0.0
        %333 = vmatprep.subr.mxu0 0.0
        %334 = vmatpush2.msra.mxu0 0.0
        %335 = vmatprep.subr.mxu0 0.0
        %336 = vmatpush2.msra.mxu0 0.0
        %337 = vmatprep.subr.mxu0 0.0
        %338 = vmatpush2.msra.mxu0 0.0
        %339 = vmatprep.subr.mxu0 0.0
        %340 = vmatpush2.msra.mxu0 0.0
        %341 = vmatprep.subr.mxu0 0.0
        %342 = vmatpush2.msra.mxu0 0.0
        %343 = vmatprep.subr.mxu0 0.0
        %344 = vmatpush2.msra.mxu0 0.0
        %345 = vmatprep.subr.mxu0 0.0
        %346 = vmatpush2.msra.mxu0 0.0
        %347 = vmatprep.subr.mxu0 0.0
        %348 = vmatpush2.msra.mxu0 0.0
        %349 = vmatprep.subr.mxu0 0.0
        %350 = vmatpush2.msra.mxu0 0.0
        %351 = vmatprep.subr.mxu0 0.0
        %352 = vmatpush2.msra.mxu0 0.0
        %353 = vmatprep.subr.mxu0 0.0
        %354 = vmatpush2.msra.mxu0 0.0
        %355 = vmatprep.subr.mxu0 0.0
        %356 = vmatpush2.msra.mxu0 0.0
        %357 = vmatprep.subr.mxu0 0.0
        %358 = vmatpush2.msra.mxu0 0.0
        %359 = vmatprep.mubr.f32.mxu0 0.0
        %360 = vmatmul.mubr.f32.gmra.mxu0 %v293
        %v361 = vpop.f32.mrf.mxu0
        %v362 = vadd.f32 0.0, %v361
        %v363 = vpop.f32.mrf.mxu0
        %364 = vdwg.mxu0
        %v365 = vld [vmem:[#allocation5] sm:$0xff]
        %v366 = vld [vmem:[#allocation5 + $0x8] sm:$0xff]
        %v367 = vld [vmem:[#allocation5 + $0x10] sm:$0xff]
        %v368 = vld [vmem:[#allocation5 + $0x18] sm:$0xff]
        %v369 = vld [vmem:[#allocation5 + $0x20] sm:$0xff]
        %v370 = vld [vmem:[#allocation5 + $0x28] sm:$0xff]
        %v371 = vld [vmem:[#allocation5 + $0x30] sm:$0xff]
        %v372 = vld [vmem:[#allocation5 + $0x38] sm:$0xff]
        %v373 = vld [vmem:[#allocation5 + $0x40] sm:$0xff]
        %v374 = vld [vmem:[#allocation5 + $0x48] sm:$0xff]
        %v375 = vld [vmem:[#allocation5 + $0x50] sm:$0xff]
        %v376 = vld [vmem:[#allocation5 + $0x58] sm:$0xff]
        %v377 = vld [vmem:[#allocation5 + $0x60] sm:$0xff]
        %v378 = vld [vmem:[#allocation5 + $0x68] sm:$0xff]
        %v379 = vld [vmem:[#allocation5 + $0x70] sm:$0xff]
        %v380 = vld [vmem:[#allocation5 + $0x78] sm:$0xff]
        %v381 = vld [vmem:[%s3] sm:$0x1]
        %v383 = vlaneseq
        %v384 = vshrl.u32 %v383, 7
        %v385 = vsub.s32 0, %v384
        %v386 = vrot.slane %v381, %v385
        %388 = vmatprep.subr.mxu0 0.0
        %389 = vmatpush1.msra.mxu0 %v380
        %390 = vmatprep.subr.mxu0 0.0
        %391 = vmatpush1.msra.mxu0 %v379
        %392 = vmatprep.subr.mxu0 0.0
        %393 = vmatpush1.msra.mxu0 %v378
        %394 = vmatprep.subr.mxu0 0.0
        %395 = vmatpush1.msra.mxu0 %v377
        %396 = vmatprep.subr.mxu0 0.0
        %397 = vmatpush1.msra.mxu0 %v376
        %398 = vmatprep.subr.mxu0 0.0
        %399 = vmatpush1.msra.mxu0 %v375
        %400 = vmatprep.subr.mxu0 0.0
        %401 = vmatpush1.msra.mxu0 %v374
        %402 = vmatprep.subr.mxu0 0.0
        %403 = vmatpush1.msra.mxu0 %v373
        %404 = vmatprep.subr.mxu0 0.0
        %405 = vmatpush1.msra.mxu0 %v372
        %406 = vmatprep.subr.mxu0 0.0
        %407 = vmatpush1.msra.mxu0 %v371
        %408 = vmatprep.subr.mxu0 0.0
        %409 = vmatpush1.msra.mxu0 %v370
        %410 = vmatprep.subr.mxu0 0.0
        %411 = vmatpush1.msra.mxu0 %v369
        %412 = vmatprep.subr.mxu0 0.0
        %413 = vmatpush1.msra.mxu0 %v368
        %414 = vmatprep.subr.mxu0 0.0
        %415 = vmatpush1.msra.mxu0 %v367
        %416 = vmatprep.subr.mxu0 0.0
        %417 = vmatpush1.msra.mxu0 %v366
        %418 = vmatprep.subr.mxu0 0.0
        %419 = vmatpush1.msra.mxu0 %v365
        %420 = vmatprep.subr.mxu0 0.0
        %421 = vmatpush2.msra.mxu0 0.0
        %422 = vmatprep.subr.mxu0 0.0
        %423 = vmatpush2.msra.mxu0 0.0
        %424 = vmatprep.subr.mxu0 0.0
        %425 = vmatpush2.msra.mxu0 0.0
        %426 = vmatprep.subr.mxu0 0.0
        %427 = vmatpush2.msra.mxu0 0.0
        %428 = vmatprep.subr.mxu0 0.0
        %429 = vmatpush2.msra.mxu0 0.0
        %430 = vmatprep.subr.mxu0 0.0
        %431 = vmatpush2.msra.mxu0 0.0
        %432 = vmatprep.subr.mxu0 0.0
        %433 = vmatpush2.msra.mxu0 0.0
        %434 = vmatprep.subr.mxu0 0.0
        %435 = vmatpush2.msra.mxu0 0.0
        %436 = vmatprep.subr.mxu0 0.0
        %437 = vmatpush2.msra.mxu0 0.0
        %438 = vmatprep.subr.mxu0 0.0
        %439 = vmatpush2.msra.mxu0 0.0
        %440 = vmatprep.subr.mxu0 0.0
        %441 = vmatpush2.msra.mxu0 0.0
        %442 = vmatprep.subr.mxu0 0.0
        %443 = vmatpush2.msra.mxu0 0.0
        %444 = vmatprep.subr.mxu0 0.0
        %445 = vmatpush2.msra.mxu0 0.0
        %446 = vmatprep.subr.mxu0 0.0
        %447 = vmatpush2.msra.mxu0 0.0
        %448 = vmatprep.subr.mxu0 0.0
        %449 = vmatpush2.msra.mxu0 0.0
        %450 = vmatprep.subr.mxu0 0.0
        %451 = vmatpush2.msra.mxu0 0.0
        %452 = vmatprep.mubr.f32.mxu0 0.0
        %453 = vmatmul.mubr.f32.gmra.mxu0 %v362
        %v454 = vpop.f32.mrf.mxu0
        %v455 = vadd.f32 %v386, %v454
        %v456 = vpop.f32.mrf.mxu0
        %457 = vdwg.mxu0
        %458 = vst [vmem:[%s218] sm:$0xff] %v455
        %s459 = sand.u32 %s117, 1
        %s460 = scalar_lea.sflag [#allocation4], %s459
        %s461 = sand.u32 %s117, 1
        %s462 = smul.addr %s461, 8
        %s463 = scalar_lea.vmem [#allocation7], %s462
        // Predicated region
        $region45: #{tpu_custom_call.1} parent=35 // pred_check
          %p464 = pneg %p127
        $region46: #{tpu_custom_call.1} parent=35 // pred_check_branch
          %466 = sbr.rel (%p464) target = $region48
        $region47: #{tpu_custom_call.1} parent=35 // pred_region
          %s468 = ssub.s32 128, 128
          %469 = vsyncadd %s460, %s468
          %s470 = smul.addr %s20, 128
          %s471 = scalar_lea.hbm %s4, %s470
          %s473 = sshll.u32 %s463, 4
          %s474 = int_to_ptr.vmem [resolvable:$true] %s473
          %476 = dma.vmem_to_hbm [thread:$0]  %s474, 128, %s471, %s460
        $region48: #{tpu_custom_call.1} parent=35 // pred_fallthru
          _
      $region36: #{tpu_custom_call.1} parent=5 // pred_fallthru
        _
      %p477 = scmp.le.s32.totalorder 2, %s15
      // Predicated region
      $region49: #{tpu_custom_call.1} parent=5 // pred_check
        %p478 = pneg %p477
      $region50: #{tpu_custom_call.1} parent=5 // pred_check_branch
        %480 = sbr.rel (%p478) target = $region52
      $region51: #{tpu_custom_call.1} parent=5 // pred_region
        %s481 = ssub.s32 %s15, 2
        // Predicated region
        $region53: #{tpu_custom_call.1} parent=51 // pred_check
          %p482 = pneg %p133
        $region54: #{tpu_custom_call.1} parent=51 // pred_check_branch
          %484 = sbr.rel (%p482) target = $region56
        $region55: #{tpu_custom_call.1} parent=51 // pred_region
          %s485 = sand.u32 %s118, 1
          %s486 = scalar_lea.sflag [#allocation4], %s485
          %s487 = sand.u32 %s118, 1
          %s488 = smul.addr %s487, 8
          %s489 = scalar_lea.vmem [#allocation7], %s488
          %490 = dma.done %s486, 128
        $region56: #{tpu_custom_call.1} parent=51 // pred_fallthru
          _
      $region52: #{tpu_custom_call.1} parent=5 // pred_fallthru
        _
    $region6: #{tpu_custom_call.1} parent=1 // loop_footer
      %s19 = sadd.s32 1, %s15
    $region7: #{tpu_custom_call.1} parent=1 // loop_footer_branch
      %14 = sbr.rel target = $region3
    $region8: #{tpu_custom_call.1} parent=1 // loop_exit
      _
    %491 = vsyncpa [#allocation3], 1
    %s492 = scalar_lea.sflag [#allocation3], 1
    %493 = vsyncpa %s492, 1
    %494 = vsyncpa [#allocation6], 1
    %495 = vsyncpa [#allocation4], 1
    %s496 = scalar_lea.sflag [#allocation4], 1
    %497 = vsyncpa %s496, 1

</llo_original>
